<compile_context>
chip_gen: v7x
topology: tpu7x:2x2x1
jax: 0.10.0
libtpu: 0.0.40
codegen_flags: <defaults>
</compile_context>

<pallas_src>
import jax
import jax.numpy as jnp
import numpy as np
from jax.experimental import pallas as pl
from jax.experimental.pallas import tpu as pltpu

EPS = 1e-5
LANE = 128


def _round_up(x, m):
    return (x + m - 1) // m * m


def resblock_kernel(x_ref, w1_ref, w2_ref, w3_ref, wd_ref, b_ref, out_ref):
    # x_ref : (1, L, Cin_p)          out_ref: (1, L, Cout_p)
    # w1_ref: (3*Cin_p, Cout_p)      w2/w3_ref: (3*Cout_p, Cout_p)
    # wd_ref: (Cin_p, Cout_p)        b_ref: (4, Cout_p) folded-BN biases [b1,b2,b3,bd]
    x = x_ref[0]                                           # (L, Cin_p)
    L, cin_p = x.shape
    cout_p = out_ref.shape[2]

    def edge_masks(c):
        row = jax.lax.broadcasted_iota(jnp.int32, (L, c), 0)
        return row == 0, row == (L - 1)

    masks_in = edge_masks(cin_p)
    masks_out = masks_in if cin_p == cout_p else edge_masks(cout_p)

    bias = b_ref[...]                                      # (4, Cout_p) f32

    def conv3_bn(h, w_ref, b, masks):
        # "same" conv (kernel_size=3, padding=1) as ONE fused MXU matmul.
        first, last = masks
        # h[l-1] / h[l+1] taps via XLU rolls; zero the wrapped boundary row
        # (this replaces explicit zero-padded scratch buffers).
        prev = jnp.where(first, 0.0, pltpu.roll(h, 1, axis=0))
        nxt = jnp.where(last, 0.0, pltpu.roll(h, h.shape[0] - 1, axis=0))
        lhs = jnp.concatenate([prev, h, nxt], axis=1)      # (L, 3*C), lane-aligned chunks
        acc = jnp.dot(lhs.astype(w_ref.dtype), w_ref[...],
                      preferred_element_type=jnp.float32)
        return acc + b                                     # folded-BN bias (scale is in W)

    h1 = jnp.maximum(conv3_bn(x, w1_ref, bias[0:1], masks_in), 0.0)    # conv1+bn1+relu
    h2 = jnp.maximum(conv3_bn(h1, w2_ref, bias[1:2], masks_out), 0.0)  # conv2+bn2+relu
    h3 = conv3_bn(h2, w3_ref, bias[2:3], masks_out)                    # conv3+bn3

    # downsample path: 1x1 conv (+ folded bn) on the original input
    res = jnp.dot(x.astype(wd_ref.dtype), wd_ref[...],
                  preferred_element_type=jnp.float32) + bias[3:4]

    out_ref[0] = jnp.maximum(h3 + res, 0.0).astype(out_ref.dtype)


def _fold_bn(gamma, beta, mean, var):
    scale = gamma / jnp.sqrt(var + EPS)
    bias = beta - mean * scale
    return scale.astype(jnp.float32), bias.astype(jnp.float32)


def _prep_conv3(w, scale, cin_p, cout_p, dtype):
    # w: (Cout, Cin, 3) PyTorch OIH layout; fold BN scale along Cout, pad channels
    # to lane-dense multiples, flatten the 3 taps along K: rows [prev | center | next].
    cout, cin, _ = w.shape
    wf = w * scale[:, None, None]
    wf = jnp.transpose(wf, (2, 1, 0))                      # (3, Cin, Cout)
    wf = jnp.pad(wf, ((0, 0), (0, cin_p - cin), (0, cout_p - cout)))
    return wf.reshape(3 * cin_p, cout_p).astype(dtype)


def _prep_conv1(w, scale, cin_p, cout_p, dtype):
    # w: (Cout, Cin, 1) -> (Cin_p, Cout_p), BN scale folded along Cout.
    cout, cin, _ = w.shape
    wf = jnp.transpose(w[:, :, 0] * scale[:, None], (1, 0))   # (Cin, Cout)
    wf = jnp.pad(wf, ((0, cin_p - cin), (0, cout_p - cout)))
    return wf.astype(dtype)


def _prep_bias(bias, cout_p):
    return jnp.pad(bias, (0, cout_p - bias.shape[0])).reshape(1, cout_p).astype(jnp.float32)


def resblock_pallas(x, params, compute_dtype=jnp.float32):
    """x: (N, Cin, L) float32, NCL like PyTorch.  Returns (N, Cout, L)."""
    N, Cin, L = x.shape
    Cout = params["w1_t"].shape[0]
    cin_p = _round_up(Cin, LANE)     # lane-dense matmul operands & output stores
    cout_p = _round_up(Cout, LANE)

    s1, b1 = _fold_bn(*params["bn1"])
    s2, b2 = _fold_bn(*params["bn2"])
    s3, b3 = _fold_bn(*params["bn3"])

    w1 = _prep_conv3(params["w1_t"], s1, cin_p, cout_p, compute_dtype)
    w2 = _prep_conv3(params["w2_t"], s2, cout_p, cout_p, compute_dtype)
    w3 = _prep_conv3(params["w3_t"], s3, cout_p, cout_p, compute_dtype)

    if params.get("wd_t") is not None:
        sd, bd = _fold_bn(*params["bnd"])
        wd = _prep_conv1(params["wd_t"], sd, cin_p, cout_p, compute_dtype)
    else:
        # Identity downsample (in_channels == out_channels, stride == 1).
        wd = jnp.eye(cin_p, cout_p, dtype=compute_dtype)
        bd = jnp.zeros((Cout,), jnp.float32)

    # All 4 folded-BN biases in one (4, Cout_p) tile.
    b_all = jnp.concatenate([_prep_bias(b, cout_p) for b in (b1, b2, b3, bd)], axis=0)

    x_nlc = jnp.transpose(x, (0, 2, 1))                            # (N, L, Cin)
    x_nlc = jnp.pad(x_nlc, ((0, 0), (0, 0), (0, cin_p - Cin)))     # (N, L, Cin_p)
    x_nlc = x_nlc.astype(compute_dtype)

    def full(shape):
        return pl.BlockSpec(shape, lambda n: (0,) * len(shape))

    out = pl.pallas_call(
        resblock_kernel,
        out_shape=jax.ShapeDtypeStruct((N, L, cout_p), jnp.float32),
        grid_spec=pltpu.PrefetchScalarGridSpec(
            num_scalar_prefetch=0,
            grid=(N,),
            in_specs=[
                pl.BlockSpec((1, L, cin_p), lambda n: (n, 0, 0)),   # x
                full((3 * cin_p, cout_p)),                          # w1 (BN1 folded)
                full((3 * cout_p, cout_p)),                         # w2 (BN2 folded)
                full((3 * cout_p, cout_p)),                         # w3 (BN3 folded)
                full((cin_p, cout_p)),                              # wd (BNd folded)
                full((4, cout_p)),                                  # biases [b1,b2,b3,bd]
            ],
            out_specs=pl.BlockSpec((1, L, cout_p), lambda n: (n, 0, 0)),
        ),
        # Batch elements are independent -> shard the grid across TensorCores.
        compiler_params=pltpu.CompilerParams(
            dimension_semantics=("parallel",)),
    )(x_nlc, w1, w2, w3, wd, b_all)

    out = out[:, :, :Cout]                                # drop padded channels
    return jnp.transpose(out, (0, 2, 1))                  # back to (N, Cout, L)


def resblock_ref(x, params):
    """Pure-JAX reference mirroring the PyTorch forward (inference-mode BN)."""
    def conv(y, w, pad):
        return jax.lax.conv_general_dilated(
            y, w, (1,), [(pad, pad)], dimension_numbers=("NCH", "OIH", "NCH"))

    def bn(y, stats):
        g, b, m, v = stats
        return (y - m[None, :, None]) / jnp.sqrt(v[None, :, None] + EPS) * g[None, :, None] \
            + b[None, :, None]

    out = jax.nn.relu(bn(conv(x, params["w1_t"], 1), params["bn1"]))
    out = jax.nn.relu(bn(conv(out, params["w2_t"], 1), params["bn2"]))
    out = bn(conv(out, params["w3_t"], 1), params["bn3"])
    if params.get("wd_t") is not None:
        residual = bn(conv(x, params["wd_t"], 0), params["bnd"])
    else:
        residual = x
    return jax.nn.relu(out + residual)


def make_params(key, Cin, Cout):
    ks = jax.random.split(key, 24)
    it = iter(range(24))

    def nrm(shape, scale=0.2):
        return (scale * jax.random.normal(ks[next(it)], shape)).astype(jnp.float32)

    def bn_stats():
        gamma = 1.0 + 0.1 * jax.random.normal(ks[next(it)], (Cout,))
        beta = 0.1 * jax.random.normal(ks[next(it)], (Cout,))
        mean = 0.1 * jax.random.normal(ks[next(it)], (Cout,))
        var = 1.0 + 0.2 * jnp.abs(jax.random.normal(ks[next(it)], (Cout,)))
        return (gamma.astype(jnp.float32), beta.astype(jnp.float32),
                mean.astype(jnp.float32), var.astype(jnp.float32))

    return {
        "w1_t": nrm((Cout, Cin, 3)),
        "w2_t": nrm((Cout, Cout, 3)),
        "w3_t": nrm((Cout, Cout, 3)),
        "wd_t": nrm((Cout, Cin, 1)),
        "bn1": bn_stats(),
        "bn2": bn_stats(),
        "bn3": bn_stats(),
        "bnd": bn_stats(),
    }


if __name__ == "__main__":
    key = jax.random.PRNGKey(0)
    k_x, k_p = jax.random.split(key)

    N, Cin, Cout, L = 2, 4, 8, 16          # in_channels != out_channels -> downsample active
    x = jax.random.normal(k_x, (N, Cin, L), dtype=jnp.float32)
    params = make_params(k_p, Cin, Cout)

    out = resblock_pallas(x, params)
    out = jax.block_until_ready(out)

    ref = jax.block_until_ready(resblock_ref(x, params))
    np.testing.assert_allclose(np.asarray(out), np.asarray(ref), atol=1e-4, rtol=1e-4)

    print("KERNEL_OK")
</pallas_src>

<mosaic_0001>
module attributes {stable_mosaic.version = 11 : i64} {
  func.func @resblock_kernel(%arg0: i32, %arg1: memref<1x16x128xf32, #tpu.memory_space<vmem>>, %arg2: memref<384x128xf32, #tpu.memory_space<vmem>>, %arg3: memref<384x128xf32, #tpu.memory_space<vmem>>, %arg4: memref<384x128xf32, #tpu.memory_space<vmem>>, %arg5: memref<128x128xf32, #tpu.memory_space<vmem>>, %arg6: memref<4x128xf32, #tpu.memory_space<vmem>>, %arg7: memref<1x16x128xf32, #tpu.memory_space<vmem>>) attributes {dimension_semantics = [#tpu.dimension_semantics<parallel>], iteration_bounds = array<i64: 2>, scalar_prefetch = 0 : i64, scratch_operands = 0 : i64, tpu.core_type = #tpu.core_type<tc>, window_params = [{transform_indices = @transform_0, window_bounds = array<i64: 1, 16, 128>}, {pipeline_mode = #tpu.pipeline_mode<synchronous>, transform_indices = @transform_1, window_bounds = array<i64: 384, 128>}, {pipeline_mode = #tpu.pipeline_mode<synchronous>, transform_indices = @transform_2, window_bounds = array<i64: 384, 128>}, {pipeline_mode = #tpu.pipeline_mode<synchronous>, transform_indices = @transform_3, window_bounds = array<i64: 384, 128>}, {pipeline_mode = #tpu.pipeline_mode<synchronous>, transform_indices = @transform_4, window_bounds = array<i64: 128, 128>}, {pipeline_mode = #tpu.pipeline_mode<synchronous>, transform_indices = @transform_5, window_bounds = array<i64: 4, 128>}, {transform_indices = @transform_6, window_bounds = array<i64: 1, 16, 128>}]} {
    %c0 = arith.constant 0 : index
    %c0_0 = arith.constant 0 : index
    %c0_1 = arith.constant 0 : index
    %0 = vector.load %arg1[%c0, %c0_0, %c0_1] : memref<1x16x128xf32, #tpu.memory_space<vmem>>, vector<1x16x128xf32>
    %1 = vector.shape_cast %0 : vector<1x16x128xf32> to vector<16x128xf32>
    %2 = tpu.iota {dimensions = array<i32: 0>} : vector<16x128xi32>
    %c0_i32 = arith.constant 0 : i32
    %3 = vector.broadcast %c0_i32 : i32 to vector<16x128xi32>
    %4 = arith.cmpi eq, %2, %3 : vector<16x128xi32>
    %c15_i32 = arith.constant 15 : i32
    %5 = vector.broadcast %c15_i32 : i32 to vector<16x128xi32>
    %6 = arith.cmpi eq, %2, %5 : vector<16x128xi32>
    %c0_2 = arith.constant 0 : index
    %c0_3 = arith.constant 0 : index
    %7 = vector.load %arg6[%c0_2, %c0_3] : memref<4x128xf32, #tpu.memory_space<vmem>>, vector<4x128xf32>
    %8 = vector.extract_strided_slice %7 {offsets = [0, 0], sizes = [1, 128], strides = [1, 1]} : vector<4x128xf32> to vector<1x128xf32>
    %c1_i32 = arith.constant 1 : i32
    %9 = tpu.dynamic_rotate %1 by %c1_i32 dim 0 : vector<16x128xf32>, i32 -> vector<16x128xf32>
    %cst = arith.constant 0.000000e+00 : f32
    %10 = vector.broadcast %cst : f32 to vector<16x128xf32>
    %11 = arith.select %4, %10, %9 : vector<16x128xi1>, vector<16x128xf32>
    %c15_i32_4 = arith.constant 15 : i32
    %12 = tpu.dynamic_rotate %1 by %c15_i32_4 dim 0 : vector<16x128xf32>, i32 -> vector<16x128xf32>
    %cst_5 = arith.constant 0.000000e+00 : f32
    %13 = vector.broadcast %cst_5 : f32 to vector<16x128xf32>
    %14 = arith.select %6, %13, %12 : vector<16x128xi1>, vector<16x128xf32>
    %15 = tpu.concatenate %11, %1, %14 in 1 : vector<16x128xf32>, vector<16x128xf32>, vector<16x128xf32> -> vector<16x384xf32>
    %c0_6 = arith.constant 0 : index
    %c0_7 = arith.constant 0 : index
    %16 = vector.load %arg2[%c0_6, %c0_7] : memref<384x128xf32, #tpu.memory_space<vmem>>, vector<384x128xf32>
    %cst_8 = arith.constant dense<0.000000e+00> : vector<16x128xf32>
    %17 = tpu.matmul %15, %16, %cst_8 {dimension_numbers = #tpu.dot_dimension_numbers<[1], [0], [0], [1], [0, 0, 1, 1], [], []>} : vector<16x384xf32>, vector<384x128xf32>, vector<16x128xf32> -> vector<16x128xf32>
    %18 = vector.broadcast %8 : vector<1x128xf32> to vector<16x128xf32>
    %19 = arith.addf %17, %18 : vector<16x128xf32>
    %cst_9 = arith.constant 0.000000e+00 : f32
    %20 = vector.broadcast %cst_9 : f32 to vector<16x128xf32>
    %21 = arith.maximumf %19, %20 : vector<16x128xf32>
    %22 = vector.extract_strided_slice %7 {offsets = [1, 0], sizes = [1, 128], strides = [1, 1]} : vector<4x128xf32> to vector<1x128xf32>
    %c1_i32_10 = arith.constant 1 : i32
    %23 = tpu.dynamic_rotate %21 by %c1_i32_10 dim 0 : vector<16x128xf32>, i32 -> vector<16x128xf32>
    %cst_11 = arith.constant 0.000000e+00 : f32
    %24 = vector.broadcast %cst_11 : f32 to vector<16x128xf32>
    %25 = arith.select %4, %24, %23 : vector<16x128xi1>, vector<16x128xf32>
    %c15_i32_12 = arith.constant 15 : i32
    %26 = tpu.dynamic_rotate %21 by %c15_i32_12 dim 0 : vector<16x128xf32>, i32 -> vector<16x128xf32>
    %cst_13 = arith.constant 0.000000e+00 : f32
    %27 = vector.broadcast %cst_13 : f32 to vector<16x128xf32>
    %28 = arith.select %6, %27, %26 : vector<16x128xi1>, vector<16x128xf32>
    %29 = tpu.concatenate %25, %21, %28 in 1 : vector<16x128xf32>, vector<16x128xf32>, vector<16x128xf32> -> vector<16x384xf32>
    %c0_14 = arith.constant 0 : index
    %c0_15 = arith.constant 0 : index
    %30 = vector.load %arg3[%c0_14, %c0_15] : memref<384x128xf32, #tpu.memory_space<vmem>>, vector<384x128xf32>
    %cst_16 = arith.constant dense<0.000000e+00> : vector<16x128xf32>
    %31 = tpu.matmul %29, %30, %cst_16 {dimension_numbers = #tpu.dot_dimension_numbers<[1], [0], [0], [1], [0, 0, 1, 1], [], []>} : vector<16x384xf32>, vector<384x128xf32>, vector<16x128xf32> -> vector<16x128xf32>
    %32 = vector.broadcast %22 : vector<1x128xf32> to vector<16x128xf32>
    %33 = arith.addf %31, %32 : vector<16x128xf32>
    %cst_17 = arith.constant 0.000000e+00 : f32
    %34 = vector.broadcast %cst_17 : f32 to vector<16x128xf32>
    %35 = arith.maximumf %33, %34 : vector<16x128xf32>
    %36 = vector.extract_strided_slice %7 {offsets = [2, 0], sizes = [1, 128], strides = [1, 1]} : vector<4x128xf32> to vector<1x128xf32>
    %c1_i32_18 = arith.constant 1 : i32
    %37 = tpu.dynamic_rotate %35 by %c1_i32_18 dim 0 : vector<16x128xf32>, i32 -> vector<16x128xf32>
    %cst_19 = arith.constant 0.000000e+00 : f32
    %38 = vector.broadcast %cst_19 : f32 to vector<16x128xf32>
    %39 = arith.select %4, %38, %37 : vector<16x128xi1>, vector<16x128xf32>
    %c15_i32_20 = arith.constant 15 : i32
    %40 = tpu.dynamic_rotate %35 by %c15_i32_20 dim 0 : vector<16x128xf32>, i32 -> vector<16x128xf32>
    %cst_21 = arith.constant 0.000000e+00 : f32
    %41 = vector.broadcast %cst_21 : f32 to vector<16x128xf32>
    %42 = arith.select %6, %41, %40 : vector<16x128xi1>, vector<16x128xf32>
    %43 = tpu.concatenate %39, %35, %42 in 1 : vector<16x128xf32>, vector<16x128xf32>, vector<16x128xf32> -> vector<16x384xf32>
    %c0_22 = arith.constant 0 : index
    %c0_23 = arith.constant 0 : index
    %44 = vector.load %arg4[%c0_22, %c0_23] : memref<384x128xf32, #tpu.memory_space<vmem>>, vector<384x128xf32>
    %cst_24 = arith.constant dense<0.000000e+00> : vector<16x128xf32>
    %45 = tpu.matmul %43, %44, %cst_24 {dimension_numbers = #tpu.dot_dimension_numbers<[1], [0], [0], [1], [0, 0, 1, 1], [], []>} : vector<16x384xf32>, vector<384x128xf32>, vector<16x128xf32> -> vector<16x128xf32>
    %46 = vector.broadcast %36 : vector<1x128xf32> to vector<16x128xf32>
    %47 = arith.addf %45, %46 : vector<16x128xf32>
    %c0_25 = arith.constant 0 : index
    %c0_26 = arith.constant 0 : index
    %48 = vector.load %arg5[%c0_25, %c0_26] : memref<128x128xf32, #tpu.memory_space<vmem>>, vector<128x128xf32>
    %cst_27 = arith.constant dense<0.000000e+00> : vector<16x128xf32>
    %49 = tpu.matmul %1, %48, %cst_27 {dimension_numbers = #tpu.dot_dimension_numbers<[1], [0], [0], [1], [0, 0, 1, 1], [], []>} : vector<16x128xf32>, vector<128x128xf32>, vector<16x128xf32> -> vector<16x128xf32>
    %50 = vector.extract_strided_slice %7 {offsets = [3, 0], sizes = [1, 128], strides = [1, 1]} : vector<4x128xf32> to vector<1x128xf32>
    %51 = vector.broadcast %50 : vector<1x128xf32> to vector<16x128xf32>
    %52 = arith.addf %49, %51 : vector<16x128xf32>
    %53 = arith.addf %47, %52 : vector<16x128xf32>
    %cst_28 = arith.constant 0.000000e+00 : f32
    %54 = vector.broadcast %cst_28 : f32 to vector<16x128xf32>
    %55 = arith.maximumf %53, %54 : vector<16x128xf32>
    %c0_29 = arith.constant 0 : index
    %c0_30 = arith.constant 0 : index
    %c0_31 = arith.constant 0 : index
    %56 = vector.load %arg7[%c0_29, %c0_30, %c0_31] : memref<1x16x128xf32, #tpu.memory_space<vmem>>, vector<1x16x128xf32>
    %57 = vector.shape_cast %56 : vector<1x16x128xf32> to vector<16x128xf32>
    %58 = vector.shape_cast %55 : vector<16x128xf32> to vector<1x16x128xf32>
    tpu.vector_store %arg7[%c0_29, %c0_30, %c0_31], %58 {strides = array<i32>} : memref<1x16x128xf32, #tpu.memory_space<vmem>>, vector<1x16x128xf32>,
    return
  }
  func.func @transform_0(%arg0: i32) -> (i32, i32, i32) {
    %c0_i32 = arith.constant 0 : i32
    %c0_i32_0 = arith.constant 0 : i32
    %c0_i32_1 = arith.constant 0 : i32
    return %arg0, %c0_i32, %c0_i32_0 : i32, i32, i32
  }
  func.func @transform_1(%arg0: i32) -> (i32, i32) {
    %c0_i32 = arith.constant 0 : i32
    %c0_i32_0 = arith.constant 0 : i32
    %c0_i32_1 = arith.constant 0 : i32
    return %c0_i32, %c0_i32_0 : i32, i32
  }
  func.func @transform_2(%arg0: i32) -> (i32, i32) {
    %c0_i32 = arith.constant 0 : i32
    %c0_i32_0 = arith.constant 0 : i32
    %c0_i32_1 = arith.constant 0 : i32
    return %c0_i32, %c0_i32_0 : i32, i32
  }
  func.func @transform_3(%arg0: i32) -> (i32, i32) {
    %c0_i32 = arith.constant 0 : i32
    %c0_i32_0 = arith.constant 0 : i32
    %c0_i32_1 = arith.constant 0 : i32
    return %c0_i32, %c0_i32_0 : i32, i32
  }
  func.func @transform_4(%arg0: i32) -> (i32, i32) {
    %c0_i32 = arith.constant 0 : i32
    %c0_i32_0 = arith.constant 0 : i32
    %c0_i32_1 = arith.constant 0 : i32
    return %c0_i32, %c0_i32_0 : i32, i32
  }
  func.func @transform_5(%arg0: i32) -> (i32, i32) {
    %c0_i32 = arith.constant 0 : i32
    %c0_i32_0 = arith.constant 0 : i32
    %c0_i32_1 = arith.constant 0 : i32
    return %c0_i32, %c0_i32_0 : i32, i32
  }
  func.func @transform_6(%arg0: i32) -> (i32, i32, i32) {
    %c0_i32 = arith.constant 0 : i32
    %c0_i32_0 = arith.constant 0 : i32
    %c0_i32_1 = arith.constant 0 : i32
    return %arg0, %c0_i32, %c0_i32_0 : i32, i32, i32
  }
}

</mosaic_0001>

<llo_original>
// kernel: tpu_custom_call.1
$region0: #{tpu_custom_call.1}
  #allocation0 [shape = 'u32[]', space=smem, size = 0x4, offset = 0x4, fixed_abs, tag = 'smem constant byte address 0x4 - core index']
  #allocation1 [shape = 'u32[144,128]{1,0:T(1,128)}', space=vmem, size = 0x12000, scoped, tag = 'internal scratch']
  %s0 = inlined_call_operand.hbm [shape: f32[2,16,128], index: 0, kind: input, shape index: {}]
  %s1 = inlined_call_operand.hbm [shape: f32[384,128], index: 1, kind: input, shape index: {}]
  %s2 = inlined_call_operand.hbm [shape: f32[384,128], index: 2, kind: input, shape index: {}]
  %s3 = inlined_call_operand.hbm [shape: f32[384,128], index: 3, kind: input, shape index: {}]
  %s4 = inlined_call_operand.hbm [shape: f32[128,128], index: 4, kind: input, shape index: {}]
  %s5 = inlined_call_operand.vmem [shape: f32[4,128], index: 5, kind: input, shape index: {}]
  %s6 = inlined_call_operand.hbm [shape: f32[2,16,128], index: 6, kind: output, shape index: {}]
  %s7 = sld [smem:[#allocation0]]
  $region77: #{tpu_custom_call.1} parent=0
    _
  %s9 = ssub.s32 1, %s7
  %s10 = scalar_select 0, %s9, %s7
  $region1: #{tpu_custom_call.1} parent=0
    #allocation2 [shape = 'u8[16384]{0}', space=vmem, size = 0x4000, scoped, tag = 'input window, operand 0']
    #allocation3 [shape = 's32[2]{0}', space=sflag, size = 0x8, scoped, tag = 'scoped memory for tpu_custom_call.1']
    #allocation4 [shape = 's32[2]{0}', space=sflag, size = 0x8, scoped, tag = 'scoped memory for tpu_custom_call.1']
    #allocation5 [shape = 'u8[196608]{0}', space=vmem, size = 0x30000, scoped, tag = 'input window, operand 1, single buffered']
    #allocation6 [shape = 's32[1]{0}', space=sflag, size = 0x4, scoped, tag = 'scoped memory for tpu_custom_call.1']
    #allocation7 [shape = 'u8[196608]{0}', space=vmem, size = 0x30000, scoped, tag = 'input window, operand 2, single buffered']
    #allocation8 [shape = 'u8[196608]{0}', space=vmem, size = 0x30000, scoped, tag = 'input window, operand 3, single buffered']
    #allocation9 [shape = 's32[1]{0}', space=sflag, size = 0x4, scoped, tag = 'scoped memory for tpu_custom_call.1']
    #allocation10 [shape = 'u8[65536]{0}', space=vmem, size = 0x10000, scoped, tag = 'input window, operand 4, single buffered']
    #allocation11 [shape = 'u8[16384]{0}', space=vmem, size = 0x4000, scoped, tag = 'output window, operand 0']
    %11 = vsyncpa [#allocation3], 0
    %s12 = scalar_lea.sflag [#allocation3], 1
    %13 = vsyncpa %s12, 0
    %14 = vsyncpa [#allocation6], 0
    %15 = vsyncpa [#allocation9], 0
    %16 = vsyncpa [#allocation4], 0
    %s17 = scalar_lea.sflag [#allocation4], 1
    %18 = vsyncpa %s17, 0
    loop: start=0, step=1, limit=4
    $region2: #{tpu_custom_call.1} parent=1 // loop_pre_header
      _
    $region3: #{tpu_custom_call.1} parent=1 // loop_header
      %s20 = sphi 0, %s24
      %p21 = scmp.ge.s32.totalorder %s20, 4
      %s30 = sphi 0, %s32
      %s33 = sphi 0, %s30
      %s34 = sphi 0, %s33
      %s50 = sphi 0, %s34
      %s54 = sphi 0, %s54
      %s56 = sphi 0, %s54
      %s57 = sphi 0, %s56
      %s71 = sphi 0, %s57
      %s75 = sphi 0, %s75
      %s77 = sphi 0, %s75
      %s78 = sphi 0, %s77
      %s92 = sphi 0, %s78
      %s96 = sphi 0, %s96
      %s98 = sphi 0, %s96
      %s99 = sphi 0, %s98
      %s113 = sphi 0, %s99
      %s117 = sphi 0, %s117
      %s119 = sphi 0, %s117
      %s120 = sphi 0, %s119
      %s134 = sphi 0, %s120
      %s138 = sphi 0, %s138
      %s140 = sphi 0, %s138
      %s141 = sphi 0, %s140
      %s155 = sphi 0, %s141
      %s161 = sphi 0, %s163
      %s164 = sphi 0, %s161
      %s165 = sphi 0, %s164
      %s181 = sphi 0, %s165
    $region4: #{tpu_custom_call.1} parent=1 // loop_header_branch
      %23 = sbr.rel (%p21) target = $region8
    $region5: #{tpu_custom_call.1} parent=1 // loop_body
      %s25 = ssub.s32 %s20, 1
      %s26 = ssub.s32 %s20, 2
      %s27 = sadd.s32 %s20, 1
      %s28 = ssub.s32 %s20, %s27
      %p29 = scmp.eq.s32.totalorder %s28, 0
      %s31 = sadd.s32 %s30, 1
      %s32 = scalar_select %p29, %s30, %s31
      %p35 = pneg %p29
      %p36 = scmp.eq.s32.totalorder %s20, 1
      %p37 = por %p35, %p36
      %p38 = scmp.ne.s32.totalorder %s30, %s33
      %p39 = scmp.eq.s32.totalorder %s20, 0
      %p40 = por %p38, %p39
      %p41 = scmp.ne.s32.totalorder %s30, %s33
      %p42 = scmp.eq.s32.totalorder %s25, 1
      %p43 = por %p41, %p42
      %p44 = scmp.ne.s32.totalorder %s33, %s34
      %p45 = scmp.eq.s32.totalorder %s25, 0
      %p46 = por %p44, %p45
      %p47 = scmp.ne.s32.totalorder %s33, %s34
      %p48 = scmp.eq.s32.totalorder %s26, 1
      %p49 = por %p47, %p48
      %p51 = scmp.ne.s32.totalorder %s34, %s50
      %p52 = scmp.eq.s32.totalorder %s26, 0
      %p53 = por %p51, %p52
      %s55 = sadd.s32 %s54, 1
      %p58 = scmp.eq.s32.totalorder %s20, 1
      %p59 = scmp.ne.s32.totalorder %s54, %s56
      %p60 = scmp.eq.s32.totalorder %s20, 0
      %p61 = por %p59, %p60
      %p62 = scmp.ne.s32.totalorder %s54, %s56
      %p63 = scmp.eq.s32.totalorder %s25, 1
      %p64 = por %p62, %p63
      %p65 = scmp.ne.s32.totalorder %s56, %s57
      %p66 = scmp.eq.s32.totalorder %s25, 0
      %p67 = por %p65, %p66
      %p68 = scmp.ne.s32.totalorder %s56, %s57
      %p69 = scmp.eq.s32.totalorder %s26, 1
      %p70 = por %p68, %p69
      %p72 = scmp.ne.s32.totalorder %s57, %s71
      %p73 = scmp.eq.s32.totalorder %s26, 0
      %p74 = por %p72, %p73
      %s76 = sadd.s32 %s75, 1
      %p79 = scmp.eq.s32.totalorder %s20, 1
      %p80 = scmp.ne.s32.totalorder %s75, %s77
      %p81 = scmp.eq.s32.totalorder %s20, 0
      %p82 = por %p80, %p81
      %p83 = scmp.ne.s32.totalorder %s75, %s77
      %p84 = scmp.eq.s32.totalorder %s25, 1
      %p85 = por %p83, %p84
      %p86 = scmp.ne.s32.totalorder %s77, %s78
      %p87 = scmp.eq.s32.totalorder %s25, 0
      %p88 = por %p86, %p87
      %p89 = scmp.ne.s32.totalorder %s77, %s78
      %p90 = scmp.eq.s32.totalorder %s26, 1
      %p91 = por %p89, %p90
      %p93 = scmp.ne.s32.totalorder %s78, %s92
      %p94 = scmp.eq.s32.totalorder %s26, 0
      %p95 = por %p93, %p94
      %s97 = sadd.s32 %s96, 1
      %p100 = scmp.eq.s32.totalorder %s20, 1
      %p101 = scmp.ne.s32.totalorder %s96, %s98
      %p102 = scmp.eq.s32.totalorder %s20, 0
      %p103 = por %p101, %p102
      %p104 = scmp.ne.s32.totalorder %s96, %s98
      %p105 = scmp.eq.s32.totalorder %s25, 1
      %p106 = por %p104, %p105
      %p107 = scmp.ne.s32.totalorder %s98, %s99
      %p108 = scmp.eq.s32.totalorder %s25, 0
      %p109 = por %p107, %p108
      %p110 = scmp.ne.s32.totalorder %s98, %s99
      %p111 = scmp.eq.s32.totalorder %s26, 1
      %p112 = por %p110, %p111
      %p114 = scmp.ne.s32.totalorder %s99, %s113
      %p115 = scmp.eq.s32.totalorder %s26, 0
      %p116 = por %p114, %p115
      %s118 = sadd.s32 %s117, 1
      %p121 = scmp.eq.s32.totalorder %s20, 1
      %p122 = scmp.ne.s32.totalorder %s117, %s119
      %p123 = scmp.eq.s32.totalorder %s20, 0
      %p124 = por %p122, %p123
      %p125 = scmp.ne.s32.totalorder %s117, %s119
      %p126 = scmp.eq.s32.totalorder %s25, 1
      %p127 = por %p125, %p126
      %p128 = scmp.ne.s32.totalorder %s119, %s120
      %p129 = scmp.eq.s32.totalorder %s25, 0
      %p130 = por %p128, %p129
      %p131 = scmp.ne.s32.totalorder %s119, %s120
      %p132 = scmp.eq.s32.totalorder %s26, 1
      %p133 = por %p131, %p132
      %p135 = scmp.ne.s32.totalorder %s120, %s134
      %p136 = scmp.eq.s32.totalorder %s26, 0
      %p137 = por %p135, %p136
      %s139 = sadd.s32 %s138, 1
      %p142 = scmp.eq.s32.totalorder %s20, 1
      %p143 = scmp.ne.s32.totalorder %s138, %s140
      %p144 = scmp.eq.s32.totalorder %s20, 0
      %p145 = por %p143, %p144
      %p146 = scmp.ne.s32.totalorder %s138, %s140
      %p147 = scmp.eq.s32.totalorder %s25, 1
      %p148 = por %p146, %p147
      %p149 = scmp.ne.s32.totalorder %s140, %s141
      %p150 = scmp.eq.s32.totalorder %s25, 0
      %p151 = por %p149, %p150
      %p152 = scmp.ne.s32.totalorder %s140, %s141
      %p153 = scmp.eq.s32.totalorder %s26, 1
      %p154 = por %p152, %p153
      %p156 = scmp.ne.s32.totalorder %s141, %s155
      %p157 = scmp.eq.s32.totalorder %s26, 0
      %p158 = por %p156, %p157
      %s159 = ssub.s32 %s20, %s27
      %p160 = scmp.eq.s32.totalorder %s159, 0
      %s162 = sadd.s32 %s161, 1
      %s163 = scalar_select %p160, %s161, %s162
      %p166 = pneg %p160
      %p167 = scmp.eq.s32.totalorder %s20, 1
      %p168 = por %p166, %p167
      %p169 = scmp.ne.s32.totalorder %s161, %s164
      %p170 = scmp.eq.s32.totalorder %s20, 0
      %p171 = por %p169, %p170
      %p172 = scmp.ne.s32.totalorder %s161, %s164
      %p173 = scmp.eq.s32.totalorder %s25, 1
      %p174 = por %p172, %p173
      %p175 = scmp.ne.s32.totalorder %s164, %s165
      %p176 = scmp.eq.s32.totalorder %s25, 0
      %p177 = por %p175, %p176
      %p178 = scmp.ne.s32.totalorder %s164, %s165
      %p179 = scmp.eq.s32.totalorder %s26, 1
      %p180 = por %p178, %p179
      %p182 = scmp.ne.s32.totalorder %s165, %s181
      %p183 = scmp.eq.s32.totalorder %s26, 0
      %p184 = por %p182, %p183
      %p185 = scmp.le.s32.totalorder 1, %s20
      %p186 = scmp.lt.s32.totalorder %s20, 3
      %p187 = pnand %p185, %p186
      %p188 = pneg %p187
      // Predicated region
      $region9: #{tpu_custom_call.1} parent=5 // pred_check
        _
      $region10: #{tpu_custom_call.1} parent=5 // pred_check_branch
        %190 = sbr.rel (%p187) target = $region12
      $region11: #{tpu_custom_call.1} parent=5 // pred_region
        %s191 = ssub.s32 %s20, 1
        // Predicated region
        $region13: #{tpu_custom_call.1} parent=11 // pred_check
          %p192 = pneg %p67
        $region14: #{tpu_custom_call.1} parent=11 // pred_check_branch
          %194 = sbr.rel (%p192) target = $region16
        $region15: #{tpu_custom_call.1} parent=11 // pred_region
          %s196 = ssub.s32 6144, 6144
          %197 = vsyncadd [#allocation6], %s196
          %s198 = sshll.u32 [#allocation5], 4
          %s199 = int_to_ptr.vmem [resolvable:$true] %s198
          %204 = dma.hbm_to_vmem [thread:$0]  %s1, 6144, %s199, [#allocation6], 128, 128, 8
        $region16: #{tpu_custom_call.1} parent=11 // pred_fallthru
          _
        // Predicated region
        $region17: #{tpu_custom_call.1} parent=11 // pred_check
          %p205 = pneg %p88
        $region18: #{tpu_custom_call.1} parent=11 // pred_check_branch
          %207 = sbr.rel (%p205) target = $region20
        $region19: #{tpu_custom_call.1} parent=11 // pred_region
          %s209 = ssub.s32 6144, 6144
          %210 = vsyncadd [#allocation6], %s209
          %s211 = sshll.u32 [#allocation7], 4
          %s212 = int_to_ptr.vmem [resolvable:$true] %s211
          %217 = dma.hbm_to_vmem [thread:$0]  %s2, 6144, %s212, [#allocation6], 128, 128, 8
        $region20: #{tpu_custom_call.1} parent=11 // pred_fallthru
          _
        // Predicated region
        $region21: #{tpu_custom_call.1} parent=11 // pred_check
          %p218 = pneg %p109
        $region22: #{tpu_custom_call.1} parent=11 // pred_check_branch
          %220 = sbr.rel (%p218) target = $region24
        $region23: #{tpu_custom_call.1} parent=11 // pred_region
          %s222 = ssub.s32 6144, 6144
          %223 = vsyncadd [#allocation9], %s222
          %s224 = sshll.u32 [#allocation8], 4
          %s225 = int_to_ptr.vmem [resolvable:$true] %s224
          %230 = dma.hbm_to_vmem [thread:$0]  %s3, 6144, %s225, [#allocation9], 128, 128, 8
        $region24: #{tpu_custom_call.1} parent=11 // pred_fallthru
          _
        // Predicated region
        $region25: #{tpu_custom_call.1} parent=11 // pred_check
          %p231 = pneg %p130
        $region26: #{tpu_custom_call.1} parent=11 // pred_check_branch
          %233 = sbr.rel (%p231) target = $region28
        $region27: #{tpu_custom_call.1} parent=11 // pred_region
          %s235 = ssub.s32 2048, 2048
          %236 = vsyncadd [#allocation9], %s235
          %s237 = sshll.u32 [#allocation10], 4
          %s238 = int_to_ptr.vmem [resolvable:$true] %s237
          %243 = dma.hbm_to_vmem [thread:$0]  %s4, 2048, %s238, [#allocation9], 128, 128, 8
        $region28: #{tpu_custom_call.1} parent=11 // pred_fallthru
          _
        // Predicated region
        $region29: #{tpu_custom_call.1} parent=11 // pred_check
          %p244 = pneg %p151
        $region30: #{tpu_custom_call.1} parent=11 // pred_check_branch
          %246 = sbr.rel (%p244) target = $region32
        $region31: #{tpu_custom_call.1} parent=11 // pred_region
          _
        $region32: #{tpu_custom_call.1} parent=11 // pred_fallthru
          _
      $region12: #{tpu_custom_call.1} parent=5 // pred_fallthru
        _
      %p247 = scmp.lt.s32.totalorder %s20, 2
      // Predicated region
      $region33: #{tpu_custom_call.1} parent=5 // pred_check
        %p248 = pneg %p247
      $region34: #{tpu_custom_call.1} parent=5 // pred_check_branch
        %250 = sbr.rel (%p248) target = $region36
      $region35: #{tpu_custom_call.1} parent=5 // pred_region
        // Predicated region
        $region37: #{tpu_custom_call.1} parent=35 // pred_check
          %p251 = pneg %p40
        $region38: #{tpu_custom_call.1} parent=35 // pred_check_branch
          %253 = sbr.rel (%p251) target = $region40
        $region39: #{tpu_custom_call.1} parent=35 // pred_region
          %s254 = sand.u32 %s30, 1
          %s255 = scalar_lea.sflag [#allocation3], %s254
          %s256 = sand.u32 %s30, 1
          %s257 = smul.addr %s256, 16
          %s258 = scalar_lea.vmem [#allocation2], %s257
          %s260 = ssub.s32 256, 256
          %261 = vsyncadd %s255, %s260
          %s262 = smul.addr %s20, 2
          %s263 = smul.addr %s262, 128
          %s264 = scalar_lea.hbm %s0, %s263
          %s265 = sshll.u32 %s258, 4
          %s266 = int_to_ptr.vmem [resolvable:$true] %s265
          %271 = dma.hbm_to_vmem [thread:$0]  %s264, 256, %s266, %s255, 128, 128, 8
        $region40: #{tpu_custom_call.1} parent=35 // pred_fallthru
          _
      $region36: #{tpu_custom_call.1} parent=5 // pred_fallthru
        _
      %p272 = scmp.le.s32.totalorder 1, %s20
      %p273 = scmp.lt.s32.totalorder %s20, 3
      %p274 = pnand %p272, %p273
      %p275 = pneg %p274
      // Predicated region
      $region41: #{tpu_custom_call.1} parent=5 // pred_check
        _
      $region42: #{tpu_custom_call.1} parent=5 // pred_check_branch
        %277 = sbr.rel (%p274) target = $region44
      $region43: #{tpu_custom_call.1} parent=5 // pred_region
        %s278 = ssub.s32 %s20, 1
        %s279 = sand.u32 %s33, 1
        %s280 = scalar_lea.sflag [#allocation3], %s279
        %s281 = sand.u32 %s33, 1
        %s282 = smul.addr %s281, 16
        %s283 = scalar_lea.vmem [#allocation2], %s282
        // Predicated region
        $region45: #{tpu_custom_call.1} parent=43 // pred_check
          %p284 = pneg %p46
        $region46: #{tpu_custom_call.1} parent=43 // pred_check_branch
          %286 = sbr.rel (%p284) target = $region48
        $region47: #{tpu_custom_call.1} parent=43 // pred_region
          %287 = dma.done %s280, 256
        $region48: #{tpu_custom_call.1} parent=43 // pred_fallthru
          _
        // Predicated region
        $region49: #{tpu_custom_call.1} parent=43 // pred_check
          %p288 = pneg %p67
        $region50: #{tpu_custom_call.1} parent=43 // pred_check_branch
          %290 = sbr.rel (%p288) target = $region52
        $region51: #{tpu_custom_call.1} parent=43 // pred_region
          %291 = dma.done [#allocation6], 6144
        $region52: #{tpu_custom_call.1} parent=43 // pred_fallthru
          _
        // Predicated region
        $region53: #{tpu_custom_call.1} parent=43 // pred_check
          %p292 = pneg %p88
        $region54: #{tpu_custom_call.1} parent=43 // pred_check_branch
          %294 = sbr.rel (%p292) target = $region56
        $region55: #{tpu_custom_call.1} parent=43 // pred_region
          %295 = dma.done [#allocation6], 6144
        $region56: #{tpu_custom_call.1} parent=43 // pred_fallthru
          _
        // Predicated region
        $region57: #{tpu_custom_call.1} parent=43 // pred_check
          %p296 = pneg %p109
        $region58: #{tpu_custom_call.1} parent=43 // pred_check_branch
          %298 = sbr.rel (%p296) target = $region60
        $region59: #{tpu_custom_call.1} parent=43 // pred_region
          %299 = dma.done [#allocation9], 6144
        $region60: #{tpu_custom_call.1} parent=43 // pred_fallthru
          _
        // Predicated region
        $region61: #{tpu_custom_call.1} parent=43 // pred_check
          %p300 = pneg %p130
        $region62: #{tpu_custom_call.1} parent=43 // pred_check_branch
          %302 = sbr.rel (%p300) target = $region64
        $region63: #{tpu_custom_call.1} parent=43 // pred_region
          %303 = dma.done [#allocation9], 2048
        $region64: #{tpu_custom_call.1} parent=43 // pred_fallthru
          _
        %s304 = sand.u32 %s33, 1
        %s305 = scalar_lea.sflag [#allocation3], %s304
        %s306 = sand.u32 %s33, 1
        %s307 = smul.addr %s306, 16
        %s308 = scalar_lea.vmem [#allocation2], %s307
        %p309 = pneg %p46
        %p310 = pneg %p43
        %p311 = pneg %p67
        %p312 = pneg %p64
        %p313 = pneg %p88
        %p314 = pneg %p85
        %p315 = pneg %p109
        %p316 = pneg %p106
        %p317 = pneg %p130
        %p318 = pneg %p127
        %p319 = pneg %p151
        %p320 = pneg %p148
        %p321 = pneg %p177
        %p322 = pneg %p174
        %s323 = sand.u32 %s164, 1
        %s324 = scalar_lea.sflag [#allocation4], %s323
        %s325 = sand.u32 %s164, 1
        %s326 = smul.addr %s325, 16
        %s327 = scalar_lea.vmem [#allocation11], %s326
        %v328 = vld [vmem:[%s283] sm:$0xff]
        %v329 = vld [vmem:[%s283 + $0x8] sm:$0xff]
        %v330 = vlaneseq
        %v331 = vshrl.u32 %v330, 7
        %v332 = vadd.s32 %v331, 8
        %vm333 = vcmp.eq.s32.totalorder %v331, 0
        %vm334 = vcmp.eq.s32.totalorder %v332, 0
        %vm335 = vcmp.eq.s32.totalorder %v331, 15
        %vm336 = vcmp.eq.s32.totalorder %v332, 15
        %v337 = vld [vmem:[%s5] sm:$0xf]
        %v338 = vrot.slane %v328, 7
        %v339 = vrot.slane %v329, 7
        %vm340 = vcmp.lt.s32.totalorder %v331, 1
        %v341 = vsel %vm340, %v338, %v339
        %v342 = vsel %vm340, %v339, %v338
        %v343 = vsel %vm333, 0.0, %v342
        %v344 = vsel %vm334, 0.0, %v341
        %v345 = vrot.slane %v328, 1
        %v346 = vrot.slane %v329, 1
        %vm347 = vcmp.lt.s32.totalorder %v331, 7
        %v348 = vsel %vm347, %v345, %v346
        %v349 = vsel %vm347, %v346, %v345
        %v350 = vsel %vm335, 0.0, %v348
        %v351 = vsel %vm336, 0.0, %v349
        %v352 = vld [vmem:[#allocation5] sm:$0xff]
        %v353 = vld [vmem:[#allocation5 + $0x8] sm:$0xff]
        %v354 = vld [vmem:[#allocation5 + $0x10] sm:$0xff]
        %v355 = vld [vmem:[#allocation5 + $0x18] sm:$0xff]
        %v356 = vld [vmem:[#allocation5 + $0x20] sm:$0xff]
        %v357 = vld [vmem:[#allocation5 + $0x28] sm:$0xff]
        %v358 = vld [vmem:[#allocation5 + $0x30] sm:$0xff]
        %v359 = vld [vmem:[#allocation5 + $0x38] sm:$0xff]
        %v360 = vld [vmem:[#allocation5 + $0x40] sm:$0xff]
        %v361 = vld [vmem:[#allocation5 + $0x48] sm:$0xff]
        %v362 = vld [vmem:[#allocation5 + $0x50] sm:$0xff]
        %v363 = vld [vmem:[#allocation5 + $0x58] sm:$0xff]
        %v364 = vld [vmem:[#allocation5 + $0x60] sm:$0xff]
        %v365 = vld [vmem:[#allocation5 + $0x68] sm:$0xff]
        %v366 = vld [vmem:[#allocation5 + $0x70] sm:$0xff]
        %v367 = vld [vmem:[#allocation5 + $0x78] sm:$0xff]
        %v368 = vld [vmem:[#allocation5 + $0x80] sm:$0xff]
        %v369 = vld [vmem:[#allocation5 + $0x88] sm:$0xff]
        %v370 = vld [vmem:[#allocation5 + $0x90] sm:$0xff]
        %v371 = vld [vmem:[#allocation5 + $0x98] sm:$0xff]
        %v372 = vld [vmem:[#allocation5 + $0xa0] sm:$0xff]
        %v373 = vld [vmem:[#allocation5 + $0xa8] sm:$0xff]
        %v374 = vld [vmem:[#allocation5 + $0xb0] sm:$0xff]
        %v375 = vld [vmem:[#allocation5 + $0xb8] sm:$0xff]
        %v376 = vld [vmem:[#allocation5 + $0xc0] sm:$0xff]
        %v377 = vld [vmem:[#allocation5 + $0xc8] sm:$0xff]
        %v378 = vld [vmem:[#allocation5 + $0xd0] sm:$0xff]
        %v379 = vld [vmem:[#allocation5 + $0xd8] sm:$0xff]
        %v380 = vld [vmem:[#allocation5 + $0xe0] sm:$0xff]
        %v381 = vld [vmem:[#allocation5 + $0xe8] sm:$0xff]
        %v382 = vld [vmem:[#allocation5 + $0xf0] sm:$0xff]
        %v383 = vld [vmem:[#allocation5 + $0xf8] sm:$0xff]
        %v384 = vld [vmem:[#allocation5 + $0x100] sm:$0xff]
        %v385 = vld [vmem:[#allocation5 + $0x108] sm:$0xff]
        %v386 = vld [vmem:[#allocation5 + $0x110] sm:$0xff]
        %v387 = vld [vmem:[#allocation5 + $0x118] sm:$0xff]
        %v388 = vld [vmem:[#allocation5 + $0x120] sm:$0xff]
        %v389 = vld [vmem:[#allocation5 + $0x128] sm:$0xff]
        %v390 = vld [vmem:[#allocation5 + $0x130] sm:$0xff]
        %v391 = vld [vmem:[#allocation5 + $0x138] sm:$0xff]
        %v392 = vld [vmem:[#allocation5 + $0x140] sm:$0xff]
        %v393 = vld [vmem:[#allocation5 + $0x148] sm:$0xff]
        %v394 = vld [vmem:[#allocation5 + $0x150] sm:$0xff]
        %v395 = vld [vmem:[#allocation5 + $0x158] sm:$0xff]
        %v396 = vld [vmem:[#allocation5 + $0x160] sm:$0xff]
        %v397 = vld [vmem:[#allocation5 + $0x168] sm:$0xff]
        %v398 = vld [vmem:[#allocation5 + $0x170] sm:$0xff]
        %v399 = vld [vmem:[#allocation5 + $0x178] sm:$0xff]
        %v400 = vlaneseq
        %v401 = vshrl.u32 %v400, 7
        %v402 = vsub.s32 0, %v401
        %v403 = vrot.slane %v337, %v402
        %404 = vmatprep.subr.mxu0 0.0
        %405 = vmatpush1.msra.mxu0 %v352
        %406 = vmatprep.subr.mxu0 0.0
        %407 = vmatpush1.msra.mxu0 %v353
        %408 = vmatprep.subr.mxu0 0.0
        %409 = vmatpush1.msra.mxu0 %v354
        %410 = vmatprep.subr.mxu0 0.0
        %411 = vmatpush1.msra.mxu0 %v355
        %412 = vmatprep.subr.mxu0 0.0
        %413 = vmatpush1.msra.mxu0 %v356
        %414 = vmatprep.subr.mxu0 0.0
        %415 = vmatpush1.msra.mxu0 %v357
        %416 = vmatprep.subr.mxu0 0.0
        %417 = vmatpush1.msra.mxu0 %v358
        %418 = vmatprep.subr.mxu0 0.0
        %419 = vmatpush1.msra.mxu0 %v359
        %420 = vmatprep.subr.mxu0 0.0
        %421 = vmatpush1.msra.mxu0 %v360
        %422 = vmatprep.subr.mxu0 0.0
        %423 = vmatpush1.msra.mxu0 %v361
        %424 = vmatprep.subr.mxu0 0.0
        %425 = vmatpush1.msra.mxu0 %v362
        %426 = vmatprep.subr.mxu0 0.0
        %427 = vmatpush1.msra.mxu0 %v363
        %428 = vmatprep.subr.mxu0 0.0
        %429 = vmatpush1.msra.mxu0 %v364
        %430 = vmatprep.subr.mxu0 0.0
        %431 = vmatpush1.msra.mxu0 %v365
        %432 = vmatprep.subr.mxu0 0.0
        %433 = vmatpush1.msra.mxu0 %v366
        %434 = vmatprep.subr.mxu0 0.0
        %435 = vmatpush1.msra.mxu0 %v367
        %436 = vmatprep.subr.mxu0 0.0
        %437 = vmatpush1.msra.mxu0 %v368
        %438 = vmatprep.subr.mxu0 0.0
        %439 = vmatpush1.msra.mxu0 %v369
        %440 = vmatprep.subr.mxu0 0.0
        %441 = vmatpush1.msra.mxu0 %v370
        %442 = vmatprep.subr.mxu0 0.0
        %443 = vmatpush1.msra.mxu0 %v371
        %444 = vmatprep.subr.mxu0 0.0
        %445 = vmatpush1.msra.mxu0 %v372
        %446 = vmatprep.subr.mxu0 0.0
        %447 = vmatpush1.msra.mxu0 %v373
        %448 = vmatprep.subr.mxu0 0.0
        %449 = vmatpush1.msra.mxu0 %v374
        %450 = vmatprep.subr.mxu0 0.0
        %451 = vmatpush1.msra.mxu0 %v375
        %452 = vmatprep.subr.mxu0 0.0
        %453 = vmatpush1.msra.mxu0 %v376
        %454 = vmatprep.subr.mxu0 0.0
        %455 = vmatpush1.msra.mxu0 %v377
        %456 = vmatprep.subr.mxu0 0.0
        %457 = vmatpush1.msra.mxu0 %v378
        %458 = vmatprep.subr.mxu0 0.0
        %459 = vmatpush1.msra.mxu0 %v379
        %460 = vmatprep.subr.mxu0 0.0
        %461 = vmatpush1.msra.mxu0 %v380
        %462 = vmatprep.subr.mxu0 0.0
        %463 = vmatpush1.msra.mxu0 %v381
        %464 = vmatprep.subr.mxu0 0.0
        %465 = vmatpush1.msra.mxu0 %v382
        %466 = vmatprep.subr.mxu0 0.0
        %467 = vmatpush1.msra.mxu0 %v383
        %468 = vmatprep.mubr.f32.mxu0 %v328
        %469 = vmatmul.mubr.f32.gmra.mrb[0].mxu0 %v343
        %v470 = vpop.f32.mrb[0].mxu0
        %v471 = vadd.f32 %v403, %v470
        %v472 = vpop.f32.mrb[0].mxu0
        %473 = vmatprep.mubr.f32.mxu0 %v329
        %474 = vmatmul.mubr.f32.gmra.mrb[0].mxu0 %v344
        %v475 = vpop.f32.mrb[0].mxu0
        %v476 = vadd.f32 %v403, %v475
        %v477 = vpop.f32.mrb[0].mxu0
        %478 = vdwg.mxu0
        %479 = vmatprep.subr.mxu0 0.0
        %480 = vmatpush1.msra.mxu0 %v384
        %481 = vmatprep.subr.mxu0 0.0
        %482 = vmatpush1.msra.mxu0 %v385
        %483 = vmatprep.subr.mxu0 0.0
        %484 = vmatpush1.msra.mxu0 %v386
        %485 = vmatprep.subr.mxu0 0.0
        %486 = vmatpush1.msra.mxu0 %v387
        %487 = vmatprep.subr.mxu0 0.0
        %488 = vmatpush1.msra.mxu0 %v388
        %489 = vmatprep.subr.mxu0 0.0
        %490 = vmatpush1.msra.mxu0 %v389
        %491 = vmatprep.subr.mxu0 0.0
        %492 = vmatpush1.msra.mxu0 %v390
        %493 = vmatprep.subr.mxu0 0.0
        %494 = vmatpush1.msra.mxu0 %v391
        %495 = vmatprep.subr.mxu0 0.0
        %496 = vmatpush1.msra.mxu0 %v392
        %497 = vmatprep.subr.mxu0 0.0
        %498 = vmatpush1.msra.mxu0 %v393
        %499 = vmatprep.subr.mxu0 0.0
        %500 = vmatpush1.msra.mxu0 %v394
        %501 = vmatprep.subr.mxu0 0.0
        %502 = vmatpush1.msra.mxu0 %v395
        %503 = vmatprep.subr.mxu0 0.0
        %504 = vmatpush1.msra.mxu0 %v396
        %505 = vmatprep.subr.mxu0 0.0
        %506 = vmatpush1.msra.mxu0 %v397
        %507 = vmatprep.subr.mxu0 0.0
        %508 = vmatpush1.msra.mxu0 %v398
        %509 = vmatprep.subr.mxu0 0.0
        %510 = vmatpush1.msra.mxu0 %v399
        %511 = vmatprep.subr.mxu0 0.0
        %512 = vmatpush1.msra.mxu0 0.0
        %513 = vmatprep.subr.mxu0 0.0
        %514 = vmatpush1.msra.mxu0 0.0
        %515 = vmatprep.subr.mxu0 0.0
        %516 = vmatpush1.msra.mxu0 0.0
        %517 = vmatprep.subr.mxu0 0.0
        %518 = vmatpush1.msra.mxu0 0.0
        %519 = vmatprep.subr.mxu0 0.0
        %520 = vmatpush1.msra.mxu0 0.0
        %521 = vmatprep.subr.mxu0 0.0
        %522 = vmatpush1.msra.mxu0 0.0
        %523 = vmatprep.subr.mxu0 0.0
        %524 = vmatpush1.msra.mxu0 0.0
        %525 = vmatprep.subr.mxu0 0.0
        %526 = vmatpush1.msra.mxu0 0.0
        %527 = vmatprep.subr.mxu0 0.0
        %528 = vmatpush1.msra.mxu0 0.0
        %529 = vmatprep.subr.mxu0 0.0
        %530 = vmatpush1.msra.mxu0 0.0
        %531 = vmatprep.subr.mxu0 0.0
        %532 = vmatpush1.msra.mxu0 0.0
        %533 = vmatprep.subr.mxu0 0.0
        %534 = vmatpush1.msra.mxu0 0.0
        %535 = vmatprep.subr.mxu0 0.0
        %536 = vmatpush1.msra.mxu0 0.0
        %537 = vmatprep.subr.mxu0 0.0
        %538 = vmatpush1.msra.mxu0 0.0
        %539 = vmatprep.subr.mxu0 0.0
        %540 = vmatpush1.msra.mxu0 0.0
        %541 = vmatprep.subr.mxu0 0.0
        %542 = vmatpush1.msra.mxu0 0.0
        %543 = vmatprep.mubr.f32.mxu0 0.0
        %544 = vmatmul.mubr.f32.gmra.mrb[0].mxu0 %v350
        %v545 = vpop.f32.mrb[0].mxu0
        %v546 = vadd.f32 %v471, %v545
        %v547 = vpop.f32.mrb[0].mxu0
        %548 = vmatprep.mubr.f32.mxu0 0.0
        %549 = vmatmul.mubr.f32.gmra.mrb[0].mxu0 %v351
        %v550 = vpop.f32.mrb[0].mxu0
        %v551 = vadd.f32 %v476, %v550
        %v552 = vpop.f32.mrb[0].mxu0
        %553 = vdwg.mxu0
        %v554 = vmax.f32 %v546, 0.0
        %v555 = vmax.f32 %v551, 0.0
        %v556 = vrot.slane %v554, 7
        %v557 = vrot.slane %v555, 7
        %v558 = vsel %vm340, %v556, %v557
        %v559 = vsel %vm340, %v557, %v556
        %v560 = vsel %vm333, 0.0, %v559
        %v561 = vsel %vm334, 0.0, %v558
        %v562 = vrot.slane %v554, 1
        %v563 = vrot.slane %v555, 1
        %v564 = vsel %vm347, %v562, %v563
        %v565 = vsel %vm347, %v563, %v562
        %v566 = vsel %vm335, 0.0, %v564
        %v567 = vsel %vm336, 0.0, %v565
        %v568 = vld [vmem:[#allocation7] sm:$0xff]
        %v569 = vld [vmem:[#allocation7 + $0x8] sm:$0xff]
        %v570 = vld [vmem:[#allocation7 + $0x10] sm:$0xff]
        %v571 = vld [vmem:[#allocation7 + $0x18] sm:$0xff]
        %v572 = vld [vmem:[#allocation7 + $0x20] sm:$0xff]
        %v573 = vld [vmem:[#allocation7 + $0x28] sm:$0xff]
        %v574 = vld [vmem:[#allocation7 + $0x30] sm:$0xff]
        %v575 = vld [vmem:[#allocation7 + $0x38] sm:$0xff]
        %v576 = vld [vmem:[#allocation7 + $0x40] sm:$0xff]
        %v577 = vld [vmem:[#allocation7 + $0x48] sm:$0xff]
        %v578 = vld [vmem:[#allocation7 + $0x50] sm:$0xff]
        %v579 = vld [vmem:[#allocation7 + $0x58] sm:$0xff]
        %v580 = vld [vmem:[#allocation7 + $0x60] sm:$0xff]
        %v581 = vld [vmem:[#allocation7 + $0x68] sm:$0xff]
        %v582 = vld [vmem:[#allocation7 + $0x70] sm:$0xff]
        %v583 = vld [vmem:[#allocation7 + $0x78] sm:$0xff]
        %v584 = vld [vmem:[#allocation7 + $0x80] sm:$0xff]
        %v585 = vld [vmem:[#allocation7 + $0x88] sm:$0xff]
        %v586 = vld [vmem:[#allocation7 + $0x90] sm:$0xff]
        %v587 = vld [vmem:[#allocation7 + $0x98] sm:$0xff]
        %v588 = vld [vmem:[#allocation7 + $0xa0] sm:$0xff]
        %v589 = vld [vmem:[#allocation7 + $0xa8] sm:$0xff]
        %v590 = vld [vmem:[#allocation7 + $0xb0] sm:$0xff]
        %v591 = vld [vmem:[#allocation7 + $0xb8] sm:$0xff]
        %v592 = vld [vmem:[#allocation7 + $0xc0] sm:$0xff]
        %v593 = vld [vmem:[#allocation7 + $0xc8] sm:$0xff]
        %v594 = vld [vmem:[#allocation7 + $0xd0] sm:$0xff]
        %v595 = vld [vmem:[#allocation7 + $0xd8] sm:$0xff]
        %v596 = vld [vmem:[#allocation7 + $0xe0] sm:$0xff]
        %v597 = vld [vmem:[#allocation7 + $0xe8] sm:$0xff]
        %v598 = vld [vmem:[#allocation7 + $0xf0] sm:$0xff]
        %v599 = vld [vmem:[#allocation7 + $0xf8] sm:$0xff]
        %v600 = vld [vmem:[#allocation7 + $0x100] sm:$0xff]
        %v601 = vld [vmem:[#allocation7 + $0x108] sm:$0xff]
        %v602 = vld [vmem:[#allocation7 + $0x110] sm:$0xff]
        %v603 = vld [vmem:[#allocation7 + $0x118] sm:$0xff]
        %v604 = vld [vmem:[#allocation7 + $0x120] sm:$0xff]
        %v605 = vld [vmem:[#allocation7 + $0x128] sm:$0xff]
        %v606 = vld [vmem:[#allocation7 + $0x130] sm:$0xff]
        %v607 = vld [vmem:[#allocation7 + $0x138] sm:$0xff]
        %v608 = vld [vmem:[#allocation7 + $0x140] sm:$0xff]
        %v609 = vld [vmem:[#allocation7 + $0x148] sm:$0xff]
        %v610 = vld [vmem:[#allocation7 + $0x150] sm:$0xff]
        %v611 = vld [vmem:[#allocation7 + $0x158] sm:$0xff]
        %v612 = vld [vmem:[#allocation7 + $0x160] sm:$0xff]
        %v613 = vld [vmem:[#allocation7 + $0x168] sm:$0xff]
        %v614 = vld [vmem:[#allocation7 + $0x170] sm:$0xff]
        %v615 = vld [vmem:[#allocation7 + $0x178] sm:$0xff]
        %v616 = vlaneseq
        %v617 = vshrl.u32 %v616, 7
        %v618 = vsub.s32 1, %v617
        %v619 = vrot.slane %v337, %v618
        %620 = vmatprep.subr.mxu0 0.0
        %621 = vmatpush1.msra.mxu0 %v568
        %622 = vmatprep.subr.mxu0 0.0
        %623 = vmatpush1.msra.mxu0 %v569
        %624 = vmatprep.subr.mxu0 0.0
        %625 = vmatpush1.msra.mxu0 %v570
        %626 = vmatprep.subr.mxu0 0.0
        %627 = vmatpush1.msra.mxu0 %v571
        %628 = vmatprep.subr.mxu0 0.0
        %629 = vmatpush1.msra.mxu0 %v572
        %630 = vmatprep.subr.mxu0 0.0
        %631 = vmatpush1.msra.mxu0 %v573
        %632 = vmatprep.subr.mxu0 0.0
        %633 = vmatpush1.msra.mxu0 %v574
        %634 = vmatprep.subr.mxu0 0.0
        %635 = vmatpush1.msra.mxu0 %v575
        %636 = vmatprep.subr.mxu0 0.0
        %637 = vmatpush1.msra.mxu0 %v576
        %638 = vmatprep.subr.mxu0 0.0
        %639 = vmatpush1.msra.mxu0 %v577
        %640 = vmatprep.subr.mxu0 0.0
        %641 = vmatpush1.msra.mxu0 %v578
        %642 = vmatprep.subr.mxu0 0.0
        %643 = vmatpush1.msra.mxu0 %v579
        %644 = vmatprep.subr.mxu0 0.0
        %645 = vmatpush1.msra.mxu0 %v580
        %646 = vmatprep.subr.mxu0 0.0
        %647 = vmatpush1.msra.mxu0 %v581
        %648 = vmatprep.subr.mxu0 0.0
        %649 = vmatpush1.msra.mxu0 %v582
        %650 = vmatprep.subr.mxu0 0.0
        %651 = vmatpush1.msra.mxu0 %v583
        %652 = vmatprep.subr.mxu0 0.0
        %653 = vmatpush1.msra.mxu0 %v584
        %654 = vmatprep.subr.mxu0 0.0
        %655 = vmatpush1.msra.mxu0 %v585
        %656 = vmatprep.subr.mxu0 0.0
        %657 = vmatpush1.msra.mxu0 %v586
        %658 = vmatprep.subr.mxu0 0.0
        %659 = vmatpush1.msra.mxu0 %v587
        %660 = vmatprep.subr.mxu0 0.0
        %661 = vmatpush1.msra.mxu0 %v588
        %662 = vmatprep.subr.mxu0 0.0
        %663 = vmatpush1.msra.mxu0 %v589
        %664 = vmatprep.subr.mxu0 0.0
        %665 = vmatpush1.msra.mxu0 %v590
        %666 = vmatprep.subr.mxu0 0.0
        %667 = vmatpush1.msra.mxu0 %v591
        %668 = vmatprep.subr.mxu0 0.0
        %669 = vmatpush1.msra.mxu0 %v592
        %670 = vmatprep.subr.mxu0 0.0
        %671 = vmatpush1.msra.mxu0 %v593
        %672 = vmatprep.subr.mxu0 0.0
        %673 = vmatpush1.msra.mxu0 %v594
        %674 = vmatprep.subr.mxu0 0.0
        %675 = vmatpush1.msra.mxu0 %v595
        %676 = vmatprep.subr.mxu0 0.0
        %677 = vmatpush1.msra.mxu0 %v596
        %678 = vmatprep.subr.mxu0 0.0
        %679 = vmatpush1.msra.mxu0 %v597
        %680 = vmatprep.subr.mxu0 0.0
        %681 = vmatpush1.msra.mxu0 %v598
        %682 = vmatprep.subr.mxu0 0.0
        %683 = vmatpush1.msra.mxu0 %v599
        %684 = vmatprep.mubr.f32.mxu0 %v554
        %685 = vmatmul.mubr.f32.gmra.mrb[0].mxu0 %v560
        %v686 = vpop.f32.mrb[0].mxu0
        %v687 = vadd.f32 %v619, %v686
        %v688 = vpop.f32.mrb[0].mxu0
        %689 = vmatprep.mubr.f32.mxu0 %v555
        %690 = vmatmul.mubr.f32.gmra.mrb[0].mxu0 %v561
        %v691 = vpop.f32.mrb[0].mxu0
        %v692 = vadd.f32 %v619, %v691
        %v693 = vpop.f32.mrb[0].mxu0
        %694 = vdwg.mxu0
        %695 = vmatprep.subr.mxu0 0.0
        %696 = vmatpush1.msra.mxu0 %v600
        %697 = vmatprep.subr.mxu0 0.0
        %698 = vmatpush1.msra.mxu0 %v601
        %699 = vmatprep.subr.mxu0 0.0
        %700 = vmatpush1.msra.mxu0 %v602
        %701 = vmatprep.subr.mxu0 0.0
        %702 = vmatpush1.msra.mxu0 %v603
        %703 = vmatprep.subr.mxu0 0.0
        %704 = vmatpush1.msra.mxu0 %v604
        %705 = vmatprep.subr.mxu0 0.0
        %706 = vmatpush1.msra.mxu0 %v605
        %707 = vmatprep.subr.mxu0 0.0
        %708 = vmatpush1.msra.mxu0 %v606
        %709 = vmatprep.subr.mxu0 0.0
        %710 = vmatpush1.msra.mxu0 %v607
        %711 = vmatprep.subr.mxu0 0.0
        %712 = vmatpush1.msra.mxu0 %v608
        %713 = vmatprep.subr.mxu0 0.0
        %714 = vmatpush1.msra.mxu0 %v609
        %715 = vmatprep.subr.mxu0 0.0
        %716 = vmatpush1.msra.mxu0 %v610
        %717 = vmatprep.subr.mxu0 0.0
        %718 = vmatpush1.msra.mxu0 %v611
        %719 = vmatprep.subr.mxu0 0.0
        %720 = vmatpush1.msra.mxu0 %v612
        %721 = vmatprep.subr.mxu0 0.0
        %722 = vmatpush1.msra.mxu0 %v613
        %723 = vmatprep.subr.mxu0 0.0
        %724 = vmatpush1.msra.mxu0 %v614
        %725 = vmatprep.subr.mxu0 0.0
        %726 = vmatpush1.msra.mxu0 %v615
        %727 = vmatprep.subr.mxu0 0.0
        %728 = vmatpush1.msra.mxu0 0.0
        %729 = vmatprep.subr.mxu0 0.0
        %730 = vmatpush1.msra.mxu0 0.0
        %731 = vmatprep.subr.mxu0 0.0
        %732 = vmatpush1.msra.mxu0 0.0
        %733 = vmatprep.subr.mxu0 0.0
        %734 = vmatpush1.msra.mxu0 0.0
        %735 = vmatprep.subr.mxu0 0.0
        %736 = vmatpush1.msra.mxu0 0.0
        %737 = vmatprep.subr.mxu0 0.0
        %738 = vmatpush1.msra.mxu0 0.0
        %739 = vmatprep.subr.mxu0 0.0
        %740 = vmatpush1.msra.mxu0 0.0
        %741 = vmatprep.subr.mxu0 0.0
        %742 = vmatpush1.msra.mxu0 0.0
        %743 = vmatprep.subr.mxu0 0.0
        %744 = vmatpush1.msra.mxu0 0.0
        %745 = vmatprep.subr.mxu0 0.0
        %746 = vmatpush1.msra.mxu0 0.0
        %747 = vmatprep.subr.mxu0 0.0
        %748 = vmatpush1.msra.mxu0 0.0
        %749 = vmatprep.subr.mxu0 0.0
        %750 = vmatpush1.msra.mxu0 0.0
        %751 = vmatprep.subr.mxu0 0.0
        %752 = vmatpush1.msra.mxu0 0.0
        %753 = vmatprep.subr.mxu0 0.0
        %754 = vmatpush1.msra.mxu0 0.0
        %755 = vmatprep.subr.mxu0 0.0
        %756 = vmatpush1.msra.mxu0 0.0
        %757 = vmatprep.subr.mxu0 0.0
        %758 = vmatpush1.msra.mxu0 0.0
        %759 = vmatprep.mubr.f32.mxu0 0.0
        %760 = vmatmul.mubr.f32.gmra.mrb[0].mxu0 %v566
        %v761 = vpop.f32.mrb[0].mxu0
        %v762 = vadd.f32 %v687, %v761
        %v763 = vpop.f32.mrb[0].mxu0
        %764 = vmatprep.mubr.f32.mxu0 0.0
        %765 = vmatmul.mubr.f32.gmra.mrb[0].mxu0 %v567
        %v766 = vpop.f32.mrb[0].mxu0
        %v767 = vadd.f32 %v692, %v766
        %v768 = vpop.f32.mrb[0].mxu0
        %769 = vdwg.mxu0
        %v770 = vmax.f32 %v762, 0.0
        %v771 = vmax.f32 %v767, 0.0
        %v772 = vrot.slane %v770, 7
        %v773 = vrot.slane %v771, 7
        %v774 = vsel %vm340, %v772, %v773
        %v775 = vsel %vm340, %v773, %v772
        %v776 = vsel %vm333, 0.0, %v775
        %v777 = vsel %vm334, 0.0, %v774
        %v778 = vrot.slane %v770, 1
        %v779 = vrot.slane %v771, 1
        %v780 = vsel %vm347, %v778, %v779
        %v781 = vsel %vm347, %v779, %v778
        %v782 = vsel %vm335, 0.0, %v780
        %v783 = vsel %vm336, 0.0, %v781
        %v784 = vld [vmem:[#allocation8] sm:$0xff]
        %v785 = vld [vmem:[#allocation8 + $0x8] sm:$0xff]
        %v786 = vld [vmem:[#allocation8 + $0x10] sm:$0xff]
        %v787 = vld [vmem:[#allocation8 + $0x18] sm:$0xff]
        %v788 = vld [vmem:[#allocation8 + $0x20] sm:$0xff]
        %v789 = vld [vmem:[#allocation8 + $0x28] sm:$0xff]
        %v790 = vld [vmem:[#allocation8 + $0x30] sm:$0xff]
        %v791 = vld [vmem:[#allocation8 + $0x38] sm:$0xff]
        %v792 = vld [vmem:[#allocation8 + $0x40] sm:$0xff]
        %v793 = vld [vmem:[#allocation8 + $0x48] sm:$0xff]
        %v794 = vld [vmem:[#allocation8 + $0x50] sm:$0xff]
        %v795 = vld [vmem:[#allocation8 + $0x58] sm:$0xff]
        %v796 = vld [vmem:[#allocation8 + $0x60] sm:$0xff]
        %v797 = vld [vmem:[#allocation8 + $0x68] sm:$0xff]
        %v798 = vld [vmem:[#allocation8 + $0x70] sm:$0xff]
        %v799 = vld [vmem:[#allocation8 + $0x78] sm:$0xff]
        %v800 = vld [vmem:[#allocation8 + $0x80] sm:$0xff]
        %v801 = vld [vmem:[#allocation8 + $0x88] sm:$0xff]
        %v802 = vld [vmem:[#allocation8 + $0x90] sm:$0xff]
        %v803 = vld [vmem:[#allocation8 + $0x98] sm:$0xff]
        %v804 = vld [vmem:[#allocation8 + $0xa0] sm:$0xff]
        %v805 = vld [vmem:[#allocation8 + $0xa8] sm:$0xff]
        %v806 = vld [vmem:[#allocation8 + $0xb0] sm:$0xff]
        %v807 = vld [vmem:[#allocation8 + $0xb8] sm:$0xff]
        %v808 = vld [vmem:[#allocation8 + $0xc0] sm:$0xff]
        %v809 = vld [vmem:[#allocation8 + $0xc8] sm:$0xff]
        %v810 = vld [vmem:[#allocation8 + $0xd0] sm:$0xff]
        %v811 = vld [vmem:[#allocation8 + $0xd8] sm:$0xff]
        %v812 = vld [vmem:[#allocation8 + $0xe0] sm:$0xff]
        %v813 = vld [vmem:[#allocation8 + $0xe8] sm:$0xff]
        %v814 = vld [vmem:[#allocation8 + $0xf0] sm:$0xff]
        %v815 = vld [vmem:[#allocation8 + $0xf8] sm:$0xff]
        %v816 = vld [vmem:[#allocation8 + $0x100] sm:$0xff]
        %v817 = vld [vmem:[#allocation8 + $0x108] sm:$0xff]
        %v818 = vld [vmem:[#allocation8 + $0x110] sm:$0xff]
        %v819 = vld [vmem:[#allocation8 + $0x118] sm:$0xff]
        %v820 = vld [vmem:[#allocation8 + $0x120] sm:$0xff]
        %v821 = vld [vmem:[#allocation8 + $0x128] sm:$0xff]
        %v822 = vld [vmem:[#allocation8 + $0x130] sm:$0xff]
        %v823 = vld [vmem:[#allocation8 + $0x138] sm:$0xff]
        %v824 = vld [vmem:[#allocation8 + $0x140] sm:$0xff]
        %v825 = vld [vmem:[#allocation8 + $0x148] sm:$0xff]
        %v826 = vld [vmem:[#allocation8 + $0x150] sm:$0xff]
        %v827 = vld [vmem:[#allocation8 + $0x158] sm:$0xff]
        %v828 = vld [vmem:[#allocation8 + $0x160] sm:$0xff]
        %v829 = vld [vmem:[#allocation8 + $0x168] sm:$0xff]
        %v830 = vld [vmem:[#allocation8 + $0x170] sm:$0xff]
        %v831 = vld [vmem:[#allocation8 + $0x178] sm:$0xff]
        %v832 = vlaneseq
        %v833 = vshrl.u32 %v832, 7
        %v834 = vsub.s32 2, %v833
        %v835 = vrot.slane %v337, %v834
        %836 = vmatprep.subr.mxu0 0.0
        %837 = vmatpush1.msra.mxu0 %v784
        %838 = vmatprep.subr.mxu0 0.0
        %839 = vmatpush1.msra.mxu0 %v785
        %840 = vmatprep.subr.mxu0 0.0
        %841 = vmatpush1.msra.mxu0 %v786
        %842 = vmatprep.subr.mxu0 0.0
        %843 = vmatpush1.msra.mxu0 %v787
        %844 = vmatprep.subr.mxu0 0.0
        %845 = vmatpush1.msra.mxu0 %v788
        %846 = vmatprep.subr.mxu0 0.0
        %847 = vmatpush1.msra.mxu0 %v789
        %848 = vmatprep.subr.mxu0 0.0
        %849 = vmatpush1.msra.mxu0 %v790
        %850 = vmatprep.subr.mxu0 0.0
        %851 = vmatpush1.msra.mxu0 %v791
        %852 = vmatprep.subr.mxu0 0.0
        %853 = vmatpush1.msra.mxu0 %v792
        %854 = vmatprep.subr.mxu0 0.0
        %855 = vmatpush1.msra.mxu0 %v793
        %856 = vmatprep.subr.mxu0 0.0
        %857 = vmatpush1.msra.mxu0 %v794
        %858 = vmatprep.subr.mxu0 0.0
        %859 = vmatpush1.msra.mxu0 %v795
        %860 = vmatprep.subr.mxu0 0.0
        %861 = vmatpush1.msra.mxu0 %v796
        %862 = vmatprep.subr.mxu0 0.0
        %863 = vmatpush1.msra.mxu0 %v797
        %864 = vmatprep.subr.mxu0 0.0
        %865 = vmatpush1.msra.mxu0 %v798
        %866 = vmatprep.subr.mxu0 0.0
        %867 = vmatpush1.msra.mxu0 %v799
        %868 = vmatprep.subr.mxu0 0.0
        %869 = vmatpush1.msra.mxu0 %v800
        %870 = vmatprep.subr.mxu0 0.0
        %871 = vmatpush1.msra.mxu0 %v801
        %872 = vmatprep.subr.mxu0 0.0
        %873 = vmatpush1.msra.mxu0 %v802
        %874 = vmatprep.subr.mxu0 0.0
        %875 = vmatpush1.msra.mxu0 %v803
        %876 = vmatprep.subr.mxu0 0.0
        %877 = vmatpush1.msra.mxu0 %v804
        %878 = vmatprep.subr.mxu0 0.0
        %879 = vmatpush1.msra.mxu0 %v805
        %880 = vmatprep.subr.mxu0 0.0
        %881 = vmatpush1.msra.mxu0 %v806
        %882 = vmatprep.subr.mxu0 0.0
        %883 = vmatpush1.msra.mxu0 %v807
        %884 = vmatprep.subr.mxu0 0.0
        %885 = vmatpush1.msra.mxu0 %v808
        %886 = vmatprep.subr.mxu0 0.0
        %887 = vmatpush1.msra.mxu0 %v809
        %888 = vmatprep.subr.mxu0 0.0
        %889 = vmatpush1.msra.mxu0 %v810
        %890 = vmatprep.subr.mxu0 0.0
        %891 = vmatpush1.msra.mxu0 %v811
        %892 = vmatprep.subr.mxu0 0.0
        %893 = vmatpush1.msra.mxu0 %v812
        %894 = vmatprep.subr.mxu0 0.0
        %895 = vmatpush1.msra.mxu0 %v813
        %896 = vmatprep.subr.mxu0 0.0
        %897 = vmatpush1.msra.mxu0 %v814
        %898 = vmatprep.subr.mxu0 0.0
        %899 = vmatpush1.msra.mxu0 %v815
        %900 = vmatprep.mubr.f32.mxu0 %v770
        %901 = vmatmul.mubr.f32.gmra.mrb[0].mxu0 %v776
        %v902 = vpop.f32.mrb[0].mxu0
        %v903 = vadd.f32 %v835, %v902
        %v904 = vpop.f32.mrb[0].mxu0
        %905 = vmatprep.mubr.f32.mxu0 %v771
        %906 = vmatmul.mubr.f32.gmra.mrb[0].mxu0 %v777
        %v907 = vpop.f32.mrb[0].mxu0
        %v908 = vadd.f32 %v835, %v907
        %v909 = vpop.f32.mrb[0].mxu0
        %910 = vdwg.mxu0
        %911 = vmatprep.subr.mxu0 0.0
        %912 = vmatpush1.msra.mxu0 %v816
        %913 = vmatprep.subr.mxu0 0.0
        %914 = vmatpush1.msra.mxu0 %v817
        %915 = vmatprep.subr.mxu0 0.0
        %916 = vmatpush1.msra.mxu0 %v818
        %917 = vmatprep.subr.mxu0 0.0
        %918 = vmatpush1.msra.mxu0 %v819
        %919 = vmatprep.subr.mxu0 0.0
        %920 = vmatpush1.msra.mxu0 %v820
        %921 = vmatprep.subr.mxu0 0.0
        %922 = vmatpush1.msra.mxu0 %v821
        %923 = vmatprep.subr.mxu0 0.0
        %924 = vmatpush1.msra.mxu0 %v822
        %925 = vmatprep.subr.mxu0 0.0
        %926 = vmatpush1.msra.mxu0 %v823
        %927 = vmatprep.subr.mxu0 0.0
        %928 = vmatpush1.msra.mxu0 %v824
        %929 = vmatprep.subr.mxu0 0.0
        %930 = vmatpush1.msra.mxu0 %v825
        %931 = vmatprep.subr.mxu0 0.0
        %932 = vmatpush1.msra.mxu0 %v826
        %933 = vmatprep.subr.mxu0 0.0
        %934 = vmatpush1.msra.mxu0 %v827
        %935 = vmatprep.subr.mxu0 0.0
        %936 = vmatpush1.msra.mxu0 %v828
        %937 = vmatprep.subr.mxu0 0.0
        %938 = vmatpush1.msra.mxu0 %v829
        %939 = vmatprep.subr.mxu0 0.0
        %940 = vmatpush1.msra.mxu0 %v830
        %941 = vmatprep.subr.mxu0 0.0
        %942 = vmatpush1.msra.mxu0 %v831
        %943 = vmatprep.subr.mxu0 0.0
        %944 = vmatpush1.msra.mxu0 0.0
        %945 = vmatprep.subr.mxu0 0.0
        %946 = vmatpush1.msra.mxu0 0.0
        %947 = vmatprep.subr.mxu0 0.0
        %948 = vmatpush1.msra.mxu0 0.0
        %949 = vmatprep.subr.mxu0 0.0
        %950 = vmatpush1.msra.mxu0 0.0
        %951 = vmatprep.subr.mxu0 0.0
        %952 = vmatpush1.msra.mxu0 0.0
        %953 = vmatprep.subr.mxu0 0.0
        %954 = vmatpush1.msra.mxu0 0.0
        %955 = vmatprep.subr.mxu0 0.0
        %956 = vmatpush1.msra.mxu0 0.0
        %957 = vmatprep.subr.mxu0 0.0
        %958 = vmatpush1.msra.mxu0 0.0
        %959 = vmatprep.subr.mxu0 0.0
        %960 = vmatpush1.msra.mxu0 0.0
        %961 = vmatprep.subr.mxu0 0.0
        %962 = vmatpush1.msra.mxu0 0.0
        %963 = vmatprep.subr.mxu0 0.0
        %964 = vmatpush1.msra.mxu0 0.0
        %965 = vmatprep.subr.mxu0 0.0
        %966 = vmatpush1.msra.mxu0 0.0
        %967 = vmatprep.subr.mxu0 0.0
        %968 = vmatpush1.msra.mxu0 0.0
        %969 = vmatprep.subr.mxu0 0.0
        %970 = vmatpush1.msra.mxu0 0.0
        %971 = vmatprep.subr.mxu0 0.0
        %972 = vmatpush1.msra.mxu0 0.0
        %973 = vmatprep.subr.mxu0 0.0
        %974 = vmatpush1.msra.mxu0 0.0
        %975 = vmatprep.mubr.f32.mxu0 0.0
        %976 = vmatmul.mubr.f32.gmra.mrb[0].mxu0 %v782
        %v977 = vpop.f32.mrb[0].mxu0
        %v978 = vadd.f32 %v903, %v977
        %v979 = vpop.f32.mrb[0].mxu0
        %980 = vmatprep.mubr.f32.mxu0 0.0
        %981 = vmatmul.mubr.f32.gmra.mrb[0].mxu0 %v783
        %v982 = vpop.f32.mrb[0].mxu0
        %v983 = vadd.f32 %v908, %v982
        %v984 = vpop.f32.mrb[0].mxu0
        %985 = vdwg.mxu0
        %v986 = vld [vmem:[#allocation10] sm:$0xff]
        %v987 = vld [vmem:[#allocation10 + $0x8] sm:$0xff]
        %v988 = vld [vmem:[#allocation10 + $0x10] sm:$0xff]
        %v989 = vld [vmem:[#allocation10 + $0x18] sm:$0xff]
        %v990 = vld [vmem:[#allocation10 + $0x20] sm:$0xff]
        %v991 = vld [vmem:[#allocation10 + $0x28] sm:$0xff]
        %v992 = vld [vmem:[#allocation10 + $0x30] sm:$0xff]
        %v993 = vld [vmem:[#allocation10 + $0x38] sm:$0xff]
        %v994 = vld [vmem:[#allocation10 + $0x40] sm:$0xff]
        %v995 = vld [vmem:[#allocation10 + $0x48] sm:$0xff]
        %v996 = vld [vmem:[#allocation10 + $0x50] sm:$0xff]
        %v997 = vld [vmem:[#allocation10 + $0x58] sm:$0xff]
        %v998 = vld [vmem:[#allocation10 + $0x60] sm:$0xff]
        %v999 = vld [vmem:[#allocation10 + $0x68] sm:$0xff]
        %v1000 = vld [vmem:[#allocation10 + $0x70] sm:$0xff]
        %v1001 = vld [vmem:[#allocation10 + $0x78] sm:$0xff]
        %v1002 = vlaneseq
        %v1003 = vshrl.u32 %v1002, 7
        %v1004 = vsub.s32 3, %v1003
        %v1005 = vrot.slane %v337, %v1004
        %1006 = vmatprep.subr.mxu0 0.0
        %1007 = vmatpush1.msra.mxu0 %v986
        %1008 = vmatprep.subr.mxu0 0.0
        %1009 = vmatpush1.msra.mxu0 %v987
        %1010 = vmatprep.subr.mxu0 0.0
        %1011 = vmatpush1.msra.mxu0 %v988
        %1012 = vmatprep.subr.mxu0 0.0
        %1013 = vmatpush1.msra.mxu0 %v989
        %1014 = vmatprep.subr.mxu0 0.0
        %1015 = vmatpush1.msra.mxu0 %v990
        %1016 = vmatprep.subr.mxu0 0.0
        %1017 = vmatpush1.msra.mxu0 %v991
        %1018 = vmatprep.subr.mxu0 0.0
        %1019 = vmatpush1.msra.mxu0 %v992
        %1020 = vmatprep.subr.mxu0 0.0
        %1021 = vmatpush1.msra.mxu0 %v993
        %1022 = vmatprep.subr.mxu0 0.0
        %1023 = vmatpush1.msra.mxu0 %v994
        %1024 = vmatprep.subr.mxu0 0.0
        %1025 = vmatpush1.msra.mxu0 %v995
        %1026 = vmatprep.subr.mxu0 0.0
        %1027 = vmatpush1.msra.mxu0 %v996
        %1028 = vmatprep.subr.mxu0 0.0
        %1029 = vmatpush1.msra.mxu0 %v997
        %1030 = vmatprep.subr.mxu0 0.0
        %1031 = vmatpush1.msra.mxu0 %v998
        %1032 = vmatprep.subr.mxu0 0.0
        %1033 = vmatpush1.msra.mxu0 %v999
        %1034 = vmatprep.subr.mxu0 0.0
        %1035 = vmatpush1.msra.mxu0 %v1000
        %1036 = vmatprep.subr.mxu0 0.0
        %1037 = vmatpush1.msra.mxu0 %v1001
        %1038 = vmatprep.subr.mxu0 0.0
        %1039 = vmatpush1.msra.mxu0 0.0
        %1040 = vmatprep.subr.mxu0 0.0
        %1041 = vmatpush1.msra.mxu0 0.0
        %1042 = vmatprep.subr.mxu0 0.0
        %1043 = vmatpush1.msra.mxu0 0.0
        %1044 = vmatprep.subr.mxu0 0.0
        %1045 = vmatpush1.msra.mxu0 0.0
        %1046 = vmatprep.subr.mxu0 0.0
        %1047 = vmatpush1.msra.mxu0 0.0
        %1048 = vmatprep.subr.mxu0 0.0
        %1049 = vmatpush1.msra.mxu0 0.0
        %1050 = vmatprep.subr.mxu0 0.0
        %1051 = vmatpush1.msra.mxu0 0.0
        %1052 = vmatprep.subr.mxu0 0.0
        %1053 = vmatpush1.msra.mxu0 0.0
        %1054 = vmatprep.subr.mxu0 0.0
        %1055 = vmatpush1.msra.mxu0 0.0
        %1056 = vmatprep.subr.mxu0 0.0
        %1057 = vmatpush1.msra.mxu0 0.0
        %1058 = vmatprep.subr.mxu0 0.0
        %1059 = vmatpush1.msra.mxu0 0.0
        %1060 = vmatprep.subr.mxu0 0.0
        %1061 = vmatpush1.msra.mxu0 0.0
        %1062 = vmatprep.subr.mxu0 0.0
        %1063 = vmatpush1.msra.mxu0 0.0
        %1064 = vmatprep.subr.mxu0 0.0
        %1065 = vmatpush1.msra.mxu0 0.0
        %1066 = vmatprep.subr.mxu0 0.0
        %1067 = vmatpush1.msra.mxu0 0.0
        %1068 = vmatprep.subr.mxu0 0.0
        %1069 = vmatpush1.msra.mxu0 0.0
        %1070 = vmatprep.mubr.f32.mxu0 0.0
        %1071 = vmatmul.mubr.f32.gmra.mrb[0].mxu0 %v328
        %v1072 = vpop.f32.mrb[0].mxu0
        %v1073 = vadd.f32 %v1005, %v1072
        %v1074 = vpop.f32.mrb[0].mxu0
        %1075 = vmatprep.mubr.f32.mxu0 0.0
        %1076 = vmatmul.mubr.f32.gmra.mrb[0].mxu0 %v329
        %v1077 = vpop.f32.mrb[0].mxu0
        %v1078 = vadd.f32 %v1005, %v1077
        %v1079 = vpop.f32.mrb[0].mxu0
        %1080 = vdwg.mxu0
        %v1081 = vadd.f32 %v978, %v1073
        %v1082 = vadd.f32 %v983, %v1078
        %v1083 = vmax.f32 %v1081, 0.0
        %v1084 = vmax.f32 %v1082, 0.0
        %1085 = vst [vmem:[%s327] sm:$0xff] %v1083
        %1086 = vst [vmem:[%s327 + $0x8] sm:$0xff] %v1084
        %s1087 = sand.u32 %s164, 1
        %s1088 = scalar_lea.sflag [#allocation4], %s1087
        %s1089 = sand.u32 %s164, 1
        %s1090 = smul.addr %s1089, 16
        %s1091 = scalar_lea.vmem [#allocation11], %s1090
        // Predicated region
        $region65: #{tpu_custom_call.1} parent=43 // pred_check
          %p1092 = pneg %p174
        $region66: #{tpu_custom_call.1} parent=43 // pred_check_branch
          %1094 = sbr.rel (%p1092) target = $region68
        $region67: #{tpu_custom_call.1} parent=43 // pred_region
          %s1096 = ssub.s32 256, 256
          %1097 = vsyncadd %s1088, %s1096
          %s1098 = smul.addr %s25, 2
          %s1099 = smul.addr %s1098, 128
          %s1100 = scalar_lea.hbm %s6, %s1099
          %s1101 = sshll.u32 %s1091, 4
          %s1102 = int_to_ptr.vmem [resolvable:$true] %s1101
          %1107 = dma.vmem_to_hbm [thread:$0]  %s1102, 256, %s1100, %s1088, 128, 128, 8
        $region68: #{tpu_custom_call.1} parent=43 // pred_fallthru
          _
      $region44: #{tpu_custom_call.1} parent=5 // pred_fallthru
        _
      %p1108 = scmp.le.s32.totalorder 2, %s20
      // Predicated region
      $region69: #{tpu_custom_call.1} parent=5 // pred_check
        %p1109 = pneg %p1108
      $region70: #{tpu_custom_call.1} parent=5 // pred_check_branch
        %1111 = sbr.rel (%p1109) target = $region72
      $region71: #{tpu_custom_call.1} parent=5 // pred_region
        %s1112 = ssub.s32 %s20, 2
        // Predicated region
        $region73: #{tpu_custom_call.1} parent=71 // pred_check
          %p1113 = pneg %p180
        $region74: #{tpu_custom_call.1} parent=71 // pred_check_branch
          %1115 = sbr.rel (%p1113) target = $region76
        $region75: #{tpu_custom_call.1} parent=71 // pred_region
          %s1116 = sand.u32 %s165, 1
          %s1117 = scalar_lea.sflag [#allocation4], %s1116
          %s1118 = sand.u32 %s165, 1
          %s1119 = smul.addr %s1118, 16
          %s1120 = scalar_lea.vmem [#allocation11], %s1119
          %1121 = dma.done %s1117, 256
        $region76: #{tpu_custom_call.1} parent=71 // pred_fallthru
          _
      $region72: #{tpu_custom_call.1} parent=5 // pred_fallthru
        _
    $region6: #{tpu_custom_call.1} parent=1 // loop_footer
      %s24 = sadd.s32 1, %s20
    $region7: #{tpu_custom_call.1} parent=1 // loop_footer_branch
      %19 = sbr.rel target = $region3
    $region8: #{tpu_custom_call.1} parent=1 // loop_exit
      _
    %1122 = vsyncpa [#allocation3], 1
    %s1123 = scalar_lea.sflag [#allocation3], 1
    %1124 = vsyncpa %s1123, 1
    %1125 = vsyncpa [#allocation6], 1
    %1126 = vsyncpa [#allocation9], 1
    %1127 = vsyncpa [#allocation4], 1
    %s1128 = scalar_lea.sflag [#allocation4], 1
    %1129 = vsyncpa %s1128, 1

</llo_original>
